<compile_context>
chip_gen: v6e
topology: v6e:2x2x1
jax: 0.10.0
libtpu: 0.0.40
codegen_flags: <defaults>
</compile_context>

<pallas_src>
import functools

import jax
import jax.numpy as jnp
from jax.experimental import pallas as pl
from jax.experimental.pallas import tpu as pltpu


# ---------------------------- tiling policy ---------------------------------
_TARGET_TILE_BYTES = 2 * 1024 * 1024   # >=1-2 MiB/step amortizes ~0.35us grid overhead
_MAX_TILE_BYTES = 8 * 1024 * 1024      # per input buffer; x2 double-buffered << 32 MiB
_F_BLOCK_CAP_BYTES = 16 * 1024         # lane-block cap: 4096 f32 / 8192 bf16 columns
_B_BLOCK_CAP = 1024                    # bounds the in-kernel row-fold unroll
_VMEM_LIMIT_BYTES = 32 * 1024 * 1024   # safe on v7x (64 MiB physical) and v5e/v6e
_PALLAS_MIN_ELEMENTS = 32768           # below this, plain XLA beats a kernel launch


def _cdiv(a, b):
    return -(-a // b)


def _round_up(a, b):
    return _cdiv(a, b) * b


def _row_align(itemsize):
    # Sublane packing: 8 rows for 32-bit, 16 for 16-bit, 32 for 8-bit dtypes.
    return {1: 32, 2: 16}.get(itemsize, 8)


def _choose_block_f(F, itemsize):
    f_floor = (F // 128) * 128
    cap = max(128, (_F_BLOCK_CAP_BYTES // itemsize) // 128 * 128)
    return max(128, min(f_floor, cap))


def _choose_block_b(B, block_f, itemsize, row_align):
    b_floor = (B // row_align) * row_align
    row_bytes = block_f * itemsize
    target_rows = _round_up(max(1, _TARGET_TILE_BYTES // row_bytes), row_align)
    vmem_rows = max(row_align, (_MAX_TILE_BYTES // row_bytes) // row_align * row_align)
    rows = min(target_rows, vmem_rows, _B_BLOCK_CAP, b_floor)
    if B >= 2 * row_align:
        # v7x has 2 TensorCores: keep at least 2 "parallel" B tiles.
        rows = min(rows, _round_up(_cdiv(B, 2), row_align))
    return max(row_align, rows)


# ------------------------------- kernel --------------------------------------
def _make_kernel(B, F, f_block_offset, need_left, need_right, need_row):
    """Masked |x| partial-sum kernel.

    Each B tile accumulates a lane-dense (8,128) f32 partial, resident across
    the feature (j) grid axis.  Boundary masks run only on boundary tiles.
    """

    def tile_partial(x_ref, i, j, end, masked):
        tb, tf = x_ref.shape
        n_groups = tb // 8
        n_lane_vregs = tf // 128
        # A few independent accumulators give VALU ILP when tf is narrow while
        # keeping total live accumulator vregs <= ~32 (no spills).
        n_acc = max(1, min(4, n_groups, 32 // max(1, n_lane_vregs)))

        col_keep = None
        if masked and (need_left or need_right):
            col = (jax.lax.broadcasted_iota(jnp.int32, (8, tf), 1)
                   + (f_block_offset + j) * tf)
            if need_left:                       # end not aligned to block_f
                col_keep = col >= end
            if need_right:                      # F not a multiple of block_f
                in_f = col < F
                col_keep = in_f if col_keep is None else jnp.logical_and(col_keep, in_f)

        accs = [None] * n_acc
        for r in range(n_groups):
            # Widen once, then abs/select in f32 (v5e has no bf16 VALU; the
            # widen is required anyway for f32 accumulation).
            v = jnp.abs(x_ref[r * 8:(r + 1) * 8, :].astype(jnp.float32))
            if masked:
                keep = col_keep
                if need_row:                    # B not a multiple of block_b
                    row = (jax.lax.broadcasted_iota(jnp.int32, (8, tf), 0)
                           + i * tb + r * 8)
                    in_b = row < B
                    keep = in_b if keep is None else jnp.logical_and(keep, in_b)
                if keep is not None:
                    # select, not multiply: NaN/Inf in padded regions must not leak
                    v = jnp.where(keep, v, 0.0)
            k = r % n_acc
            accs[k] = v if accs[k] is None else accs[k] + v
        acc = accs[0]
        for a in accs[1:]:
            acc = acc + a
        # Lane fold (8, tf) -> (8, 128): tile-aligned slices, pure VALU.
        out = acc[:, 0:128]
        for c in range(1, n_lane_vregs):
            out = out + acc[:, c * 128:(c + 1) * 128]
        return out

    any_mask = need_left or need_right or need_row

    def kernel(end_ref, x_ref, out_ref):
        i = pl.program_id(0)
        j = pl.program_id(1)

        @pl.when(j == 0)
        def _init():
            out_ref[...] = jnp.zeros_like(out_ref)

        if not any_mask:
            out_ref[...] += tile_partial(x_ref, i, j, None, masked=False)
            return

        conds = []
        if need_left:
            conds.append(j == 0)
        if need_right:
            conds.append(j == pl.num_programs(1) - 1)
        if need_row:
            conds.append(i == pl.num_programs(0) - 1)
        is_boundary = conds[0]
        for c in conds[1:]:
            is_boundary = jnp.logical_or(is_boundary, c)

        end = end_ref[0]

        @pl.when(is_boundary)
        def _boundary():
            out_ref[...] += tile_partial(x_ref, i, j, end, masked=True)

        @pl.when(jnp.logical_not(is_boundary))
        def _interior():
            out_ref[...] += tile_partial(x_ref, i, j, None, masked=False)

    return kernel


@functools.lru_cache(maxsize=None)
def _get_feature_penalty_fn(B, F, dtype_name, block_b, block_f, f_block_offset,
                            nb, nfc, need_left, need_right, need_row):
    """Build + memoize the jitted pallas_call for one static configuration."""
    del dtype_name  # cache-key only; jit re-specializes on the array dtype.
    kernel = _make_kernel(B, F, f_block_offset, need_left, need_right, need_row)
    pc = pl.pallas_call(
        kernel,
        out_shape=jax.ShapeDtypeStruct((nb * 8, 128), jnp.float32),
        grid_spec=pltpu.PrefetchScalarGridSpec(
            num_scalar_prefetch=1,
            grid=(nb, nfc),
            in_specs=[pl.BlockSpec((block_b, block_f),
                                   lambda i, j, end_ref: (i, j + f_block_offset))],
            out_specs=pl.BlockSpec((8, 128), lambda i, j, end_ref: (i, 0)),
        ),
        compiler_params=pltpu.CompilerParams(
            dimension_semantics=("parallel", "arbitrary"),
            vmem_limit_bytes=_VMEM_LIMIT_BYTES,
        ),
    )

    def run(end_arr, x, inv_count):
        partials = pc(end_arr, x)          # (nb*8, 128) lane-dense partials
        return jnp.sum(partials) * inv_count

    return jax.jit(run)


# ------------------------------ wrapper ---------------------------------------
def feature_penalty_loss(batch_feature, end_index, *, use_pallas=None,
                         block_b=None, block_f=None):
    """mean(|x[:, end_index:]|)  (== nn.L1Loss(x[:, end:], zeros)).

    Returns Python None if the penalized tail is empty (PyTorch parity; this
    type instability means you cannot jit over the epoch schedule).
    end_index must be a static Python int (the epoch schedule is Python-side).
    """
    B, F = batch_feature.shape
    end_index = int(end_index)
    tail = F - end_index
    if tail <= 0:
        return None                         # PyTorch: loss stays None

    itemsize = jnp.dtype(batch_feature.dtype).itemsize
    row_align = _row_align(itemsize)

    # Shapes below one packed (rows,128) tile or tiny workloads: plain XLA is
    # faster than a custom-call launch and avoids layout edge cases.
    pallas_ok = (B >= row_align) and (F >= 128)
    if use_pallas is None:
        use_pallas = pallas_ok and (B * tail >= _PALLAS_MIN_ELEMENTS)
    if not (use_pallas and pallas_ok):
        return jnp.mean(jnp.abs(batch_feature[:, end_index:]).astype(jnp.float32))

    if block_f is None:
        block_f = _choose_block_f(F, itemsize)
    if block_b is None:
        block_b = _choose_block_b(B, block_f, itemsize, row_align)
    assert block_f % 128 == 0 and 128 <= block_f <= F, block_f
    assert block_b % row_align == 0 and row_align <= block_b <= B, block_b

    # Skip DMA of un-penalized columns: start the column grid at the first
    # block intersecting [end_index, F).
    f_block_offset = end_index // block_f
    col_start = f_block_offset * block_f
    nb = _cdiv(B, block_b)
    nfc = _cdiv(F - col_start, block_f)

    need_left = (end_index % block_f) != 0
    need_right = (F % block_f) != 0
    need_row = (B % block_b) != 0

    fn = _get_feature_penalty_fn(B, F, str(batch_feature.dtype), block_b, block_f,
                                 f_block_offset, nb, nfc,
                                 need_left, need_right, need_row)
    end_arr = jnp.asarray([end_index], dtype=jnp.int32)
    inv_count = jnp.asarray(1.0 / (float(B) * float(tail)), dtype=jnp.float32)
    return fn(end_arr, batch_feature, inv_count)


class FeaturePenaltyPallas:
    """JAX/Pallas port of FeaturePenalty (forward path). No learnable parameters."""

    def __init__(self, total_dimension, total_epoch, reverse=False, base=8,
                 start_dimension=None, rescale=False, topK=False):
        assert total_dimension % base == 0, 'total_dimension must be totally split by base'
        if start_dimension is not None:
            assert total_dimension >= start_dimension
        self.total_dimension = total_dimension
        self.total_epoch = total_epoch
        self.base = base
        self.reverse = reverse
        self.start_dimension = start_dimension if start_dimension is not None else base
        self.rescale = rescale
        self.topK = topK                      # unused by zero_feature_by_endIndex
        self.encountered_epoch = []
        self.batchIdToEndIndex = self.get_batchIdToEndIndex(
            total_dimension, total_epoch, base, reverse=reverse,
            start_dimension=self.start_dimension)
        self.current_dim = self.batchIdToEndIndex[0]

    @staticmethod
    def get_batchIdToEndIndex(total_dimension, total_epoch, base, reverse=False,
                              start_dimension=None):
        batchIdToEndIndex = {}
        start_dimension = base if start_dimension is None else start_dimension
        num_expand = (total_dimension - start_dimension) // base
        to_expand = total_epoch // num_expand
        dim = start_dimension
        for epoch in range(total_epoch):
            if epoch % to_expand == 0 and epoch != 0:
                dim += base
            if not reverse:
                batchIdToEndIndex[epoch] = dim
            else:
                batchIdToEndIndex[total_epoch - epoch - 1] = dim
        return batchIdToEndIndex

    def forward(self, batch_feature, epoch):
        self.current_dim = self.batchIdToEndIndex[epoch]
        if epoch not in self.encountered_epoch:
            self.encountered_epoch.append(epoch)   # tracked silently (no prints)
        return feature_penalty_loss(batch_feature, self.current_dim)

    __call__ = forward


if __name__ == "__main__":
    # Small but kernel-worthy shapes: batch=256, feature dim (total_dimension)=512.
    B, F = 256, 512
    key = jax.random.PRNGKey(0)
    x = jax.random.normal(key, (B, F), dtype=jnp.float32)

    fp = FeaturePenaltyPallas(total_dimension=F, total_epoch=8, base=64,
                              start_dimension=64)

    # Epoch 2 -> end_index = 192 (not a multiple of 128 -> exercises the
    # left-boundary lane mask).
    epoch = 2
    end_index = fp.batchIdToEndIndex[epoch]
    assert end_index == 192

    ref = jnp.mean(jnp.abs(x[:, end_index:]))

    # 1) Auto-tiled Pallas path (block_b = 128 -> 2 parallel B tiles for v7x).
    loss = jax.block_until_ready(fp(x, epoch))
    assert jnp.allclose(loss, ref, rtol=2e-5, atol=1e-6), (loss, ref)

    # Second call with the same config hits the memoized pallas_call / jit cache.
    loss_again = jax.block_until_ready(fp(x, epoch))
    assert jnp.allclose(loss_again, loss)

    # 2) Forced small blocks -> 4x3 grid: interior fast-path tiles plus a
    #    masked left-boundary column tile, column-offset index_map.
    loss2 = jax.block_until_ready(
        feature_penalty_loss(x, end_index, use_pallas=True, block_b=64, block_f=128))
    assert jnp.allclose(loss2, ref, rtol=2e-5, atol=1e-6), (loss2, ref)

    # 3) bf16 input: half the HBM traffic, widen-once + f32 accumulation,
    #    16-row sublane-packed block_b.
    xb = x.astype(jnp.bfloat16)
    loss_b = jax.block_until_ready(
        feature_penalty_loss(xb, end_index, use_pallas=True))
    ref_b = jnp.mean(jnp.abs(xb.astype(jnp.float32)[:, end_index:]))
    assert jnp.allclose(loss_b, ref_b, rtol=1e-3, atol=1e-3), (loss_b, ref_b)

    # 4) Tiny shapes take the XLA fallback (launch overhead dominates there).
    x_small = jax.random.normal(jax.random.PRNGKey(1), (8, 32), dtype=jnp.float32)
    ls = jax.block_until_ready(feature_penalty_loss(x_small, 16))
    assert jnp.allclose(ls, jnp.mean(jnp.abs(x_small[:, 16:])), rtol=1e-5, atol=1e-6)

    # 5) end_index == F -> no penalized columns -> None (matches PyTorch).
    assert fp(x, 7) is None
    assert feature_penalty_loss(x, F) is None

    print("KERNEL_OK")
</pallas_src>

<mosaic_0001>
module attributes {stable_mosaic.version = 11 : i64} {
  func.func @kernel(%arg0: i32, %arg1: i32, %arg2: memref<1xi32, #tpu.memory_space<smem>>, %arg3: memref<128x512xf32, #tpu.memory_space<vmem>>, %arg4: memref<8x128xf32, #tpu.memory_space<vmem>>) attributes {dimension_semantics = [#tpu.dimension_semantics<parallel>, #tpu.dimension_semantics<arbitrary>], iteration_bounds = array<i64: 2, 1>, scalar_prefetch = 1 : i64, scratch_operands = 0 : i64, tpu.core_type = #tpu.core_type<tc>, window_params = [{transform_indices = @transform_0, window_bounds = array<i64: 128, 512>}, {transform_indices = @transform_1, window_bounds = array<i64: 8, 128>}]} {
    %c0_i32 = arith.constant 0 : i32
    %0 = arith.cmpi eq, %arg1, %c0_i32 : i32
    %1 = arith.extui %0 : i1 to i32
    %c0_i32_0 = arith.constant 0 : i32
    %2 = arith.cmpi ne, %1, %c0_i32_0 : i32
    scf.if %2 {
      %cst = arith.constant 0.000000e+00 : f32
      %10 = vector.broadcast %cst : f32 to vector<8x128xf32>
      %c0_4 = arith.constant 0 : index
      %c0_5 = arith.constant 0 : index
      %11 = vector.load %arg4[%c0_4, %c0_5] : memref<8x128xf32, #tpu.memory_space<vmem>>, vector<8x128xf32>
      tpu.vector_store %arg4[%c0_4, %c0_5], %10 {strides = array<i32>} : memref<8x128xf32, #tpu.memory_space<vmem>>, vector<8x128xf32>,
    } else {
    }
    %c0_i32_1 = arith.constant 0 : i32
    %3 = arith.cmpi eq, %arg1, %c0_i32_1 : i32
    %c0 = arith.constant 0 : index
    %4 = memref.load %arg2[%c0] : memref<1xi32, #tpu.memory_space<smem>>
    %5 = arith.extui %3 : i1 to i32
    %c0_i32_2 = arith.constant 0 : i32
    %6 = arith.cmpi ne, %5, %c0_i32_2 : i32
    scf.if %6 {
      %c0_4 = arith.constant 0 : index
      %c0_5 = arith.constant 0 : index
      %10 = vector.load %arg4[%c0_4, %c0_5] : memref<8x128xf32, #tpu.memory_space<vmem>>, vector<8x128xf32>
      %11 = tpu.iota {dimensions = array<i32: 1>} : vector<8x512xi32>
      %c0_i32_6 = arith.constant 0 : i32
      %12 = arith.addi %c0_i32_6, %arg1 : i32
      %c512_i32 = arith.constant 512 : i32
      %13 = arith.muli %12, %c512_i32 : i32
      %14 = vector.broadcast %13 : i32 to vector<8x512xi32>
      %15 = arith.addi %11, %14 : vector<8x512xi32>
      %16 = vector.broadcast %4 : i32 to vector<8x512xi32>
      %17 = arith.cmpi sge, %15, %16 : vector<8x512xi32>
      %c0_7 = arith.constant 0 : index
      %c0_8 = arith.constant 0 : index
      %18 = vector.load %arg3[%c0_7, %c0_8] : memref<128x512xf32, #tpu.memory_space<vmem>>, vector<8x512xf32>
      %19 = math.absf %18 : vector<8x512xf32>
      %cst = arith.constant 0.000000e+00 : f32
      %20 = vector.broadcast %cst : f32 to vector<8x512xf32>
      %21 = arith.select %17, %19, %20 : vector<8x512xi1>, vector<8x512xf32>
      %c8 = arith.constant 8 : index
      %c0_9 = arith.constant 0 : index
      %22 = vector.load %arg3[%c8, %c0_9] : memref<128x512xf32, #tpu.memory_space<vmem>>, vector<8x512xf32>
      %23 = math.absf %22 : vector<8x512xf32>
      %cst_10 = arith.constant 0.000000e+00 : f32
      %24 = vector.broadcast %cst_10 : f32 to vector<8x512xf32>
      %25 = arith.select %17, %23, %24 : vector<8x512xi1>, vector<8x512xf32>
      %c16 = arith.constant 16 : index
      %c0_11 = arith.constant 0 : index
      %26 = vector.load %arg3[%c16, %c0_11] : memref<128x512xf32, #tpu.memory_space<vmem>>, vector<8x512xf32>
      %27 = math.absf %26 : vector<8x512xf32>
      %cst_12 = arith.constant 0.000000e+00 : f32
      %28 = vector.broadcast %cst_12 : f32 to vector<8x512xf32>
      %29 = arith.select %17, %27, %28 : vector<8x512xi1>, vector<8x512xf32>
      %c24 = arith.constant 24 : index
      %c0_13 = arith.constant 0 : index
      %30 = vector.load %arg3[%c24, %c0_13] : memref<128x512xf32, #tpu.memory_space<vmem>>, vector<8x512xf32>
      %31 = math.absf %30 : vector<8x512xf32>
      %cst_14 = arith.constant 0.000000e+00 : f32
      %32 = vector.broadcast %cst_14 : f32 to vector<8x512xf32>
      %33 = arith.select %17, %31, %32 : vector<8x512xi1>, vector<8x512xf32>
      %c32 = arith.constant 32 : index
      %c0_15 = arith.constant 0 : index
      %34 = vector.load %arg3[%c32, %c0_15] : memref<128x512xf32, #tpu.memory_space<vmem>>, vector<8x512xf32>
      %35 = math.absf %34 : vector<8x512xf32>
      %cst_16 = arith.constant 0.000000e+00 : f32
      %36 = vector.broadcast %cst_16 : f32 to vector<8x512xf32>
      %37 = arith.select %17, %35, %36 : vector<8x512xi1>, vector<8x512xf32>
      %38 = arith.addf %21, %37 : vector<8x512xf32>
      %c40 = arith.constant 40 : index
      %c0_17 = arith.constant 0 : index
      %39 = vector.load %arg3[%c40, %c0_17] : memref<128x512xf32, #tpu.memory_space<vmem>>, vector<8x512xf32>
      %40 = math.absf %39 : vector<8x512xf32>
      %cst_18 = arith.constant 0.000000e+00 : f32
      %41 = vector.broadcast %cst_18 : f32 to vector<8x512xf32>
      %42 = arith.select %17, %40, %41 : vector<8x512xi1>, vector<8x512xf32>
      %43 = arith.addf %25, %42 : vector<8x512xf32>
      %c48 = arith.constant 48 : index
      %c0_19 = arith.constant 0 : index
      %44 = vector.load %arg3[%c48, %c0_19] : memref<128x512xf32, #tpu.memory_space<vmem>>, vector<8x512xf32>
      %45 = math.absf %44 : vector<8x512xf32>
      %cst_20 = arith.constant 0.000000e+00 : f32
      %46 = vector.broadcast %cst_20 : f32 to vector<8x512xf32>
      %47 = arith.select %17, %45, %46 : vector<8x512xi1>, vector<8x512xf32>
      %48 = arith.addf %29, %47 : vector<8x512xf32>
      %c56 = arith.constant 56 : index
      %c0_21 = arith.constant 0 : index
      %49 = vector.load %arg3[%c56, %c0_21] : memref<128x512xf32, #tpu.memory_space<vmem>>, vector<8x512xf32>
      %50 = math.absf %49 : vector<8x512xf32>
      %cst_22 = arith.constant 0.000000e+00 : f32
      %51 = vector.broadcast %cst_22 : f32 to vector<8x512xf32>
      %52 = arith.select %17, %50, %51 : vector<8x512xi1>, vector<8x512xf32>
      %53 = arith.addf %33, %52 : vector<8x512xf32>
      %c64 = arith.constant 64 : index
      %c0_23 = arith.constant 0 : index
      %54 = vector.load %arg3[%c64, %c0_23] : memref<128x512xf32, #tpu.memory_space<vmem>>, vector<8x512xf32>
      %55 = math.absf %54 : vector<8x512xf32>
      %cst_24 = arith.constant 0.000000e+00 : f32
      %56 = vector.broadcast %cst_24 : f32 to vector<8x512xf32>
      %57 = arith.select %17, %55, %56 : vector<8x512xi1>, vector<8x512xf32>
      %58 = arith.addf %38, %57 : vector<8x512xf32>
      %c72 = arith.constant 72 : index
      %c0_25 = arith.constant 0 : index
      %59 = vector.load %arg3[%c72, %c0_25] : memref<128x512xf32, #tpu.memory_space<vmem>>, vector<8x512xf32>
      %60 = math.absf %59 : vector<8x512xf32>
      %cst_26 = arith.constant 0.000000e+00 : f32
      %61 = vector.broadcast %cst_26 : f32 to vector<8x512xf32>
      %62 = arith.select %17, %60, %61 : vector<8x512xi1>, vector<8x512xf32>
      %63 = arith.addf %43, %62 : vector<8x512xf32>
      %c80 = arith.constant 80 : index
      %c0_27 = arith.constant 0 : index
      %64 = vector.load %arg3[%c80, %c0_27] : memref<128x512xf32, #tpu.memory_space<vmem>>, vector<8x512xf32>
      %65 = math.absf %64 : vector<8x512xf32>
      %cst_28 = arith.constant 0.000000e+00 : f32
      %66 = vector.broadcast %cst_28 : f32 to vector<8x512xf32>
      %67 = arith.select %17, %65, %66 : vector<8x512xi1>, vector<8x512xf32>
      %68 = arith.addf %48, %67 : vector<8x512xf32>
      %c88 = arith.constant 88 : index
      %c0_29 = arith.constant 0 : index
      %69 = vector.load %arg3[%c88, %c0_29] : memref<128x512xf32, #tpu.memory_space<vmem>>, vector<8x512xf32>
      %70 = math.absf %69 : vector<8x512xf32>
      %cst_30 = arith.constant 0.000000e+00 : f32
      %71 = vector.broadcast %cst_30 : f32 to vector<8x512xf32>
      %72 = arith.select %17, %70, %71 : vector<8x512xi1>, vector<8x512xf32>
      %73 = arith.addf %53, %72 : vector<8x512xf32>
      %c96 = arith.constant 96 : index
      %c0_31 = arith.constant 0 : index
      %74 = vector.load %arg3[%c96, %c0_31] : memref<128x512xf32, #tpu.memory_space<vmem>>, vector<8x512xf32>
      %75 = math.absf %74 : vector<8x512xf32>
      %cst_32 = arith.constant 0.000000e+00 : f32
      %76 = vector.broadcast %cst_32 : f32 to vector<8x512xf32>
      %77 = arith.select %17, %75, %76 : vector<8x512xi1>, vector<8x512xf32>
      %78 = arith.addf %58, %77 : vector<8x512xf32>
      %c104 = arith.constant 104 : index
      %c0_33 = arith.constant 0 : index
      %79 = vector.load %arg3[%c104, %c0_33] : memref<128x512xf32, #tpu.memory_space<vmem>>, vector<8x512xf32>
      %80 = math.absf %79 : vector<8x512xf32>
      %cst_34 = arith.constant 0.000000e+00 : f32
      %81 = vector.broadcast %cst_34 : f32 to vector<8x512xf32>
      %82 = arith.select %17, %80, %81 : vector<8x512xi1>, vector<8x512xf32>
      %83 = arith.addf %63, %82 : vector<8x512xf32>
      %c112 = arith.constant 112 : index
      %c0_35 = arith.constant 0 : index
      %84 = vector.load %arg3[%c112, %c0_35] : memref<128x512xf32, #tpu.memory_space<vmem>>, vector<8x512xf32>
      %85 = math.absf %84 : vector<8x512xf32>
      %cst_36 = arith.constant 0.000000e+00 : f32
      %86 = vector.broadcast %cst_36 : f32 to vector<8x512xf32>
      %87 = arith.select %17, %85, %86 : vector<8x512xi1>, vector<8x512xf32>
      %88 = arith.addf %68, %87 : vector<8x512xf32>
      %c120 = arith.constant 120 : index
      %c0_37 = arith.constant 0 : index
      %89 = vector.load %arg3[%c120, %c0_37] : memref<128x512xf32, #tpu.memory_space<vmem>>, vector<8x512xf32>
      %90 = math.absf %89 : vector<8x512xf32>
      %cst_38 = arith.constant 0.000000e+00 : f32
      %91 = vector.broadcast %cst_38 : f32 to vector<8x512xf32>
      %92 = arith.select %17, %90, %91 : vector<8x512xi1>, vector<8x512xf32>
      %93 = arith.addf %73, %92 : vector<8x512xf32>
      %94 = arith.addf %78, %83 : vector<8x512xf32>
      %95 = arith.addf %94, %88 : vector<8x512xf32>
      %96 = arith.addf %95, %93 : vector<8x512xf32>
      %97 = vector.extract_strided_slice %96 {offsets = [0, 0], sizes = [8, 128], strides = [1, 1]} : vector<8x512xf32> to vector<8x128xf32>
      %98 = vector.extract_strided_slice %96 {offsets = [0, 128], sizes = [8, 128], strides = [1, 1]} : vector<8x512xf32> to vector<8x128xf32>
      %99 = arith.addf %97, %98 : vector<8x128xf32>
      %100 = vector.extract_strided_slice %96 {offsets = [0, 256], sizes = [8, 128], strides = [1, 1]} : vector<8x512xf32> to vector<8x128xf32>
      %101 = arith.addf %99, %100 : vector<8x128xf32>
      %102 = vector.extract_strided_slice %96 {offsets = [0, 384], sizes = [8, 128], strides = [1, 1]} : vector<8x512xf32> to vector<8x128xf32>
      %103 = arith.addf %101, %102 : vector<8x128xf32>
      %104 = arith.addf %10, %103 : vector<8x128xf32>
      %c0_39 = arith.constant 0 : index
      %c0_40 = arith.constant 0 : index
      %105 = vector.load %arg4[%c0_39, %c0_40] : memref<8x128xf32, #tpu.memory_space<vmem>>, vector<8x128xf32>
      tpu.vector_store %arg4[%c0_39, %c0_40], %104 {strides = array<i32>} : memref<8x128xf32, #tpu.memory_space<vmem>>, vector<8x128xf32>,
    } else {
    }
    %true = arith.constant true
    %7 = arith.xori %3, %true : i1
    %8 = arith.extui %7 : i1 to i32
    %c0_i32_3 = arith.constant 0 : i32
    %9 = arith.cmpi ne, %8, %c0_i32_3 : i32
    scf.if %9 {
      %c0_4 = arith.constant 0 : index
      %c0_5 = arith.constant 0 : index
      %10 = vector.load %arg4[%c0_4, %c0_5] : memref<8x128xf32, #tpu.memory_space<vmem>>, vector<8x128xf32>
      %c0_6 = arith.constant 0 : index
      %c0_7 = arith.constant 0 : index
      %11 = vector.load %arg3[%c0_6, %c0_7] : memref<128x512xf32, #tpu.memory_space<vmem>>, vector<8x512xf32>
      %12 = math.absf %11 : vector<8x512xf32>
      %c8 = arith.constant 8 : index
      %c0_8 = arith.constant 0 : index
      %13 = vector.load %arg3[%c8, %c0_8] : memref<128x512xf32, #tpu.memory_space<vmem>>, vector<8x512xf32>
      %14 = math.absf %13 : vector<8x512xf32>
      %c16 = arith.constant 16 : index
      %c0_9 = arith.constant 0 : index
      %15 = vector.load %arg3[%c16, %c0_9] : memref<128x512xf32, #tpu.memory_space<vmem>>, vector<8x512xf32>
      %16 = math.absf %15 : vector<8x512xf32>
      %c24 = arith.constant 24 : index
      %c0_10 = arith.constant 0 : index
      %17 = vector.load %arg3[%c24, %c0_10] : memref<128x512xf32, #tpu.memory_space<vmem>>, vector<8x512xf32>
      %18 = math.absf %17 : vector<8x512xf32>
      %c32 = arith.constant 32 : index
      %c0_11 = arith.constant 0 : index
      %19 = vector.load %arg3[%c32, %c0_11] : memref<128x512xf32, #tpu.memory_space<vmem>>, vector<8x512xf32>
      %20 = math.absf %19 : vector<8x512xf32>
      %21 = arith.addf %12, %20 : vector<8x512xf32>
      %c40 = arith.constant 40 : index
      %c0_12 = arith.constant 0 : index
      %22 = vector.load %arg3[%c40, %c0_12] : memref<128x512xf32, #tpu.memory_space<vmem>>, vector<8x512xf32>
      %23 = math.absf %22 : vector<8x512xf32>
      %24 = arith.addf %14, %23 : vector<8x512xf32>
      %c48 = arith.constant 48 : index
      %c0_13 = arith.constant 0 : index
      %25 = vector.load %arg3[%c48, %c0_13] : memref<128x512xf32, #tpu.memory_space<vmem>>, vector<8x512xf32>
      %26 = math.absf %25 : vector<8x512xf32>
      %27 = arith.addf %16, %26 : vector<8x512xf32>
      %c56 = arith.constant 56 : index
      %c0_14 = arith.constant 0 : index
      %28 = vector.load %arg3[%c56, %c0_14] : memref<128x512xf32, #tpu.memory_space<vmem>>, vector<8x512xf32>
      %29 = math.absf %28 : vector<8x512xf32>
      %30 = arith.addf %18, %29 : vector<8x512xf32>
      %c64 = arith.constant 64 : index
      %c0_15 = arith.constant 0 : index
      %31 = vector.load %arg3[%c64, %c0_15] : memref<128x512xf32, #tpu.memory_space<vmem>>, vector<8x512xf32>
      %32 = math.absf %31 : vector<8x512xf32>
      %33 = arith.addf %21, %32 : vector<8x512xf32>
      %c72 = arith.constant 72 : index
      %c0_16 = arith.constant 0 : index
      %34 = vector.load %arg3[%c72, %c0_16] : memref<128x512xf32, #tpu.memory_space<vmem>>, vector<8x512xf32>
      %35 = math.absf %34 : vector<8x512xf32>
      %36 = arith.addf %24, %35 : vector<8x512xf32>
      %c80 = arith.constant 80 : index
      %c0_17 = arith.constant 0 : index
      %37 = vector.load %arg3[%c80, %c0_17] : memref<128x512xf32, #tpu.memory_space<vmem>>, vector<8x512xf32>
      %38 = math.absf %37 : vector<8x512xf32>
      %39 = arith.addf %27, %38 : vector<8x512xf32>
      %c88 = arith.constant 88 : index
      %c0_18 = arith.constant 0 : index
      %40 = vector.load %arg3[%c88, %c0_18] : memref<128x512xf32, #tpu.memory_space<vmem>>, vector<8x512xf32>
      %41 = math.absf %40 : vector<8x512xf32>
      %42 = arith.addf %30, %41 : vector<8x512xf32>
      %c96 = arith.constant 96 : index
      %c0_19 = arith.constant 0 : index
      %43 = vector.load %arg3[%c96, %c0_19] : memref<128x512xf32, #tpu.memory_space<vmem>>, vector<8x512xf32>
      %44 = math.absf %43 : vector<8x512xf32>
      %45 = arith.addf %33, %44 : vector<8x512xf32>
      %c104 = arith.constant 104 : index
      %c0_20 = arith.constant 0 : index
      %46 = vector.load %arg3[%c104, %c0_20] : memref<128x512xf32, #tpu.memory_space<vmem>>, vector<8x512xf32>
      %47 = math.absf %46 : vector<8x512xf32>
      %48 = arith.addf %36, %47 : vector<8x512xf32>
      %c112 = arith.constant 112 : index
      %c0_21 = arith.constant 0 : index
      %49 = vector.load %arg3[%c112, %c0_21] : memref<128x512xf32, #tpu.memory_space<vmem>>, vector<8x512xf32>
      %50 = math.absf %49 : vector<8x512xf32>
      %51 = arith.addf %39, %50 : vector<8x512xf32>
      %c120 = arith.constant 120 : index
      %c0_22 = arith.constant 0 : index
      %52 = vector.load %arg3[%c120, %c0_22] : memref<128x512xf32, #tpu.memory_space<vmem>>, vector<8x512xf32>
      %53 = math.absf %52 : vector<8x512xf32>
      %54 = arith.addf %42, %53 : vector<8x512xf32>
      %55 = arith.addf %45, %48 : vector<8x512xf32>
      %56 = arith.addf %55, %51 : vector<8x512xf32>
      %57 = arith.addf %56, %54 : vector<8x512xf32>
      %58 = vector.extract_strided_slice %57 {offsets = [0, 0], sizes = [8, 128], strides = [1, 1]} : vector<8x512xf32> to vector<8x128xf32>
      %59 = vector.extract_strided_slice %57 {offsets = [0, 128], sizes = [8, 128], strides = [1, 1]} : vector<8x512xf32> to vector<8x128xf32>
      %60 = arith.addf %58, %59 : vector<8x128xf32>
      %61 = vector.extract_strided_slice %57 {offsets = [0, 256], sizes = [8, 128], strides = [1, 1]} : vector<8x512xf32> to vector<8x128xf32>
      %62 = arith.addf %60, %61 : vector<8x128xf32>
      %63 = vector.extract_strided_slice %57 {offsets = [0, 384], sizes = [8, 128], strides = [1, 1]} : vector<8x512xf32> to vector<8x128xf32>
      %64 = arith.addf %62, %63 : vector<8x128xf32>
      %65 = arith.addf %10, %64 : vector<8x128xf32>
      %c0_23 = arith.constant 0 : index
      %c0_24 = arith.constant 0 : index
      %66 = vector.load %arg4[%c0_23, %c0_24] : memref<8x128xf32, #tpu.memory_space<vmem>>, vector<8x128xf32>
      tpu.vector_store %arg4[%c0_23, %c0_24], %65 {strides = array<i32>} : memref<8x128xf32, #tpu.memory_space<vmem>>, vector<8x128xf32>,
    } else {
    }
    return
  }
  func.func @transform_0(%arg0: i32, %arg1: i32, %arg2: memref<1xi32, #tpu.memory_space<smem>>) -> (i32, i32) {
    %c0_i32 = arith.constant 0 : i32
    %0 = arith.addi %arg1, %c0_i32 : i32
    %c0_i32_0 = arith.constant 0 : i32
    return %arg0, %0 : i32, i32
  }
  func.func @transform_1(%arg0: i32, %arg1: i32, %arg2: memref<1xi32, #tpu.memory_space<smem>>) -> (i32, i32) {
    %c0_i32 = arith.constant 0 : i32
    %c0_i32_0 = arith.constant 0 : i32
    return %arg0, %c0_i32 : i32, i32
  }
}

</mosaic_0001>

<llo_original>
// kernel: run.1
$region0: #{run.1}
  #allocation0 [shape = 'u32[]', space=smem, size = 0x4, offset = 0x4, fixed_abs, tag = 'smem constant byte address 0x4 - core index']
  #allocation1 [shape = 'u32[144,128]{1,0:T(1,128)}', space=vmem, size = 0x12000, scoped, tag = 'internal scratch']
  #allocation2 [shape = 's32[1]{0}', space=sflag, size = 0x4, scoped, tag = 'scoped memory for run.1']
  #allocation3 [shape = 's32[1]{0:T(128)S(6)}', space=smem, size = 0x200, scoped, tag = 'prefetched SMEM operand 0']
  %s0 = inlined_call_operand.<no memory space> [shape: s32[1], index: 0, kind: input, shape index: {}]
  %s1 = inlined_call_operand.hbm [shape: f32[256,512], index: 1, kind: input, shape index: {}]
  %s2 = inlined_call_operand.vmem [shape: f32[16,128], index: 2, kind: output, shape index: {}]
  %s3 = sld [smem:[#allocation0]]
  $region53: #{run.1} parent=0
    _
  %s5 = ssub.s32 1, %s3
  %s6 = scalar_select 0, %s5, %s3
  %7 = sst [smem:[#allocation3]] %s0
  $region1: #{run.1} parent=0
    #allocation4 [shape = 'u8[524288]{0}', space=vmem, size = 0x80000, scoped, tag = 'input window, operand 1']
    #allocation5 [shape = 's32[2]{0}', space=sflag, size = 0x8, scoped, tag = 'scoped memory for run.1']
    %8 = vsyncpa [#allocation5], 0
    %s9 = scalar_lea.sflag [#allocation5], 1
    %10 = vsyncpa %s9, 0
    loop: start=0, step=1, limit=4
    $region2: #{run.1} parent=1 // loop_pre_header
      _
    $region3: #{run.1} parent=1 // loop_header
      %s12 = sphi 0, %s16
      %p13 = scmp.ge.s32.totalorder %s12, 4
      %s19 = sphi 0, %s31
      %s20 = sphi 0, %s27
      %s21 = sphi 0, %s19
      %s22 = sphi 0, %s20
      %s23 = sphi 0, %s21
      %s24 = sphi 0, %s22
      %s36 = sphi 0, %s38
      %s39 = sphi 0, %s36
      %s40 = sphi 0, %s39
      %s56 = sphi 0, %s40
      %s62 = sphi 0, %s64
      %s65 = sphi 0, %s62
      %s66 = sphi 0, %s65
      %s82 = sphi 0, %s66
    $region4: #{run.1} parent=1 // loop_header_branch
      %15 = sbr.rel (%p13) target = $region8
    $region5: #{run.1} parent=1 // loop_body
      %s17 = ssub.s32 %s12, 1
      %s18 = ssub.s32 %s12, 2
      %s25 = sadd.s32 1, %s20
      %p26 = scmp.ge.s32.totalorder %s25, 1
      %s27 = scalar_select %p26, 0, %s25
      %s28 = sadd.s32 1, %s19
      %s29 = scalar_select %p26, %s28, %s19
      %p30 = scmp.ge.s32.totalorder %s29, 2
      %s31 = scalar_select %p30, 0, %s29
      %s32 = ssub.s32 %s19, %s31
      %s33 = ssub.s32 %s20, %s27
      %s34 = sor.u32 %s32, %s33
      %p35 = scmp.eq.s32.totalorder %s34, 0
      %s37 = sadd.s32 %s36, 1
      %s38 = scalar_select %p35, %s36, %s37
      %p41 = pneg %p35
      %p42 = scmp.eq.s32.totalorder %s12, 1
      %p43 = por %p41, %p42
      %p44 = scmp.ne.s32.totalorder %s36, %s39
      %p45 = scmp.eq.s32.totalorder %s12, 0
      %p46 = por %p44, %p45
      %p47 = scmp.ne.s32.totalorder %s36, %s39
      %p48 = scmp.eq.s32.totalorder %s17, 1
      %p49 = por %p47, %p48
      %p50 = scmp.ne.s32.totalorder %s39, %s40
      %p51 = scmp.eq.s32.totalorder %s17, 0
      %p52 = por %p50, %p51
      %p53 = scmp.ne.s32.totalorder %s39, %s40
      %p54 = scmp.eq.s32.totalorder %s18, 1
      %p55 = por %p53, %p54
      %p57 = scmp.ne.s32.totalorder %s40, %s56
      %p58 = scmp.eq.s32.totalorder %s18, 0
      %p59 = por %p57, %p58
      %s60 = ssub.s32 %s19, %s31
      %p61 = scmp.eq.s32.totalorder %s60, 0
      %s63 = sadd.s32 %s62, 1
      %s64 = scalar_select %p61, %s62, %s63
      %p67 = pneg %p61
      %p68 = scmp.eq.s32.totalorder %s12, 1
      %p69 = por %p67, %p68
      %p70 = scmp.ne.s32.totalorder %s62, %s65
      %p71 = scmp.eq.s32.totalorder %s12, 0
      %p72 = por %p70, %p71
      %p73 = scmp.ne.s32.totalorder %s62, %s65
      %p74 = scmp.eq.s32.totalorder %s17, 1
      %p75 = por %p73, %p74
      %p76 = scmp.ne.s32.totalorder %s65, %s66
      %p77 = scmp.eq.s32.totalorder %s17, 0
      %p78 = por %p76, %p77
      %p79 = scmp.ne.s32.totalorder %s65, %s66
      %p80 = scmp.eq.s32.totalorder %s18, 1
      %p81 = por %p79, %p80
      %p83 = scmp.ne.s32.totalorder %s66, %s82
      %p84 = scmp.eq.s32.totalorder %s18, 0
      %p85 = por %p83, %p84
      %p86 = scmp.le.s32.totalorder 1, %s12
      %p87 = scmp.lt.s32.totalorder %s12, 3
      %p88 = pnand %p86, %p87
      %p89 = pneg %p88
      // Predicated region
      $region9: #{run.1} parent=5 // pred_check
        _
      $region10: #{run.1} parent=5 // pred_check_branch
        %91 = sbr.rel (%p88) target = $region12
      $region11: #{run.1} parent=5 // pred_region
        %s92 = ssub.s32 %s12, 1
      $region12: #{run.1} parent=5 // pred_fallthru
        _
      %p93 = scmp.lt.s32.totalorder %s12, 2
      // Predicated region
      $region13: #{run.1} parent=5 // pred_check
        %p94 = pneg %p93
      $region14: #{run.1} parent=5 // pred_check_branch
        %96 = sbr.rel (%p94) target = $region16
      $region15: #{run.1} parent=5 // pred_region
        // Predicated region
        $region17: #{run.1} parent=15 // pred_check
          %p97 = pneg %p46
        $region18: #{run.1} parent=15 // pred_check_branch
          %99 = sbr.rel (%p97) target = $region20
        $region19: #{run.1} parent=15 // pred_region
          %s100 = sand.u32 %s36, 1
          %s101 = scalar_lea.sflag [#allocation5], %s100
          %s102 = sand.u32 %s36, 1
          %s103 = smul.addr %s102, 512
          %s104 = scalar_lea.vmem [#allocation4], %s103
          %s105 = smul.u32 16, %s19
          %s106 = smul.u32 4, %s20
          %s108 = ssub.s32 8192, 8192
          %109 = vsyncadd %s101, %s108
          %s110 = smul.addr %s105, 4
          %s111 = sadd.s32 %s106, %s110
          %s112 = smul.addr %s111, 128
          %s113 = scalar_lea.hbm %s1, %s112
          %s114 = sshll.u32 %s104, 4
          %s115 = int_to_ptr.vmem [resolvable:$true] %s114
          %120 = dma.hbm_to_vmem [thread:$0]  %s113, 8192, %s115, %s101, 512, 512, 32
        $region20: #{run.1} parent=15 // pred_fallthru
          _
      $region16: #{run.1} parent=5 // pred_fallthru
        _
      %p121 = scmp.le.s32.totalorder 1, %s12
      %p122 = scmp.lt.s32.totalorder %s12, 3
      %p123 = pnand %p121, %p122
      %p124 = pneg %p123
      // Predicated region
      $region21: #{run.1} parent=5 // pred_check
        _
      $region22: #{run.1} parent=5 // pred_check_branch
        %126 = sbr.rel (%p123) target = $region24
      $region23: #{run.1} parent=5 // pred_region
        %s127 = ssub.s32 %s12, 1
        %s128 = sand.u32 %s39, 1
        %s129 = scalar_lea.sflag [#allocation5], %s128
        %s130 = sand.u32 %s39, 1
        %s131 = smul.addr %s130, 512
        %s132 = scalar_lea.vmem [#allocation4], %s131
        // Predicated region
        $region25: #{run.1} parent=23 // pred_check
          %p133 = pneg %p52
        $region26: #{run.1} parent=23 // pred_check_branch
          %135 = sbr.rel (%p133) target = $region28
        $region27: #{run.1} parent=23 // pred_region
          %136 = dma.done %s129, 8192
        $region28: #{run.1} parent=23 // pred_fallthru
          _
        %s137 = sand.u32 %s39, 1
        %s138 = scalar_lea.sflag [#allocation5], %s137
        %s139 = sand.u32 %s39, 1
        %s140 = smul.addr %s139, 512
        %s141 = scalar_lea.vmem [#allocation4], %s140
        %p142 = pneg %p52
        %p143 = pneg %p49
        %p144 = pneg %p78
        %p145 = pneg %p75
        %p146 = scmp.lt.s32.totalorder %s21, 1
        %s147 = scalar_select %p146, %s21, 1
        %s148 = smul.addr %s147, 8
        %s149 = scalar_lea.vmem %s2, %s148
        %s150 = smul.u32 16, %s21
        %s151 = smul.u32 4, %s22
        %p152 = scmp.lt.s32.totalorder %s21, 1
        %s153 = scalar_select %p152, %s21, 1
        %s154 = smul.addr %s153, 8
        %s155 = scalar_lea.vmem %s2, %s154
        %p156 = scmp.eq.s32.totalorder %s22, 0
        // Predicated region
        $region29: #{run.1} parent=23 // pred_check
          %p157 = pneg %p156
        $region30: #{run.1} parent=23 // pred_check_branch
          %159 = sbr.rel (%p157) target = $region32
        $region31: #{run.1} parent=23 // pred_region
          %160 = vst [vmem:[%s155] sm:$0xff] 0.0
        $region32: #{run.1} parent=23 // pred_fallthru
          _
        %s161 = sld [smem:[#allocation3]]
        // Predicated region
        $region33: #{run.1} parent=23 // pred_check
          %p162 = pneg %p156
        $region34: #{run.1} parent=23 // pred_check_branch
          %164 = sbr.rel (%p162) target = $region36
        $region35: #{run.1} parent=23 // pred_region
          %v165 = vld [vmem:[%s155] sm:$0xff]
          %v166 = vlaneseq
          %v167 = vand.u32 %v166, 127
          %v168 = vadd.s32 %v167, 128
          %v169 = vadd.s32 %v167, 256
          %v170 = vadd.s32 %v167, 384
          %s171 = smul.u32 %s22, 512
          %v172 = vstv %s171
          %v173 = vadd.s32 %v167, %v172
          %v174 = vadd.s32 %v168, %v172
          %v175 = vadd.s32 %v169, %v172
          %v176 = vadd.s32 %v170, %v172
          %v177 = vstv %s161
          %vm178 = vcmp.ge.s32.totalorder %v173, %v177
          %vm179 = vcmp.ge.s32.totalorder %v174, %v177
          %vm180 = vcmp.ge.s32.totalorder %v175, %v177
          %vm181 = vcmp.ge.s32.totalorder %v176, %v177
          %v182 = vld [vmem:[%s132] sm:$0xff]
          %v183 = vld [vmem:[%s132 + $0x8] sm:$0xff]
          %v184 = vld [vmem:[%s132 + $0x10] sm:$0xff]
          %v185 = vld [vmem:[%s132 + $0x18] sm:$0xff]
          %v186 = vand.u32 2147483647, %v182
          %v187 = vand.u32 2147483647, %v183
          %v188 = vand.u32 2147483647, %v184
          %v189 = vand.u32 2147483647, %v185
          %v190 = vsel %vm178, %v186, 0.0
          %v191 = vsel %vm179, %v187, 0.0
          %v192 = vsel %vm180, %v188, 0.0
          %v193 = vsel %vm181, %v189, 0.0
          %v194 = vld [vmem:[%s132 + $0x20] sm:$0xff]
          %v195 = vld [vmem:[%s132 + $0x28] sm:$0xff]
          %v196 = vld [vmem:[%s132 + $0x30] sm:$0xff]
          %v197 = vld [vmem:[%s132 + $0x38] sm:$0xff]
          %v198 = vand.u32 2147483647, %v194
          %v199 = vand.u32 2147483647, %v195
          %v200 = vand.u32 2147483647, %v196
          %v201 = vand.u32 2147483647, %v197
          %v202 = vsel %vm178, %v198, 0.0
          %v203 = vsel %vm179, %v199, 0.0
          %v204 = vsel %vm180, %v200, 0.0
          %v205 = vsel %vm181, %v201, 0.0
          %v206 = vld [vmem:[%s132 + $0x40] sm:$0xff]
          %v207 = vld [vmem:[%s132 + $0x48] sm:$0xff]
          %v208 = vld [vmem:[%s132 + $0x50] sm:$0xff]
          %v209 = vld [vmem:[%s132 + $0x58] sm:$0xff]
          %v210 = vand.u32 2147483647, %v206
          %v211 = vand.u32 2147483647, %v207
          %v212 = vand.u32 2147483647, %v208
          %v213 = vand.u32 2147483647, %v209
          %v214 = vsel %vm178, %v210, 0.0
          %v215 = vsel %vm179, %v211, 0.0
          %v216 = vsel %vm180, %v212, 0.0
          %v217 = vsel %vm181, %v213, 0.0
          %v218 = vld [vmem:[%s132 + $0x60] sm:$0xff]
          %v219 = vld [vmem:[%s132 + $0x68] sm:$0xff]
          %v220 = vld [vmem:[%s132 + $0x70] sm:$0xff]
          %v221 = vld [vmem:[%s132 + $0x78] sm:$0xff]
          %v222 = vand.u32 2147483647, %v218
          %v223 = vand.u32 2147483647, %v219
          %v224 = vand.u32 2147483647, %v220
          %v225 = vand.u32 2147483647, %v221
          %v226 = vsel %vm178, %v222, 0.0
          %v227 = vsel %vm179, %v223, 0.0
          %v228 = vsel %vm180, %v224, 0.0
          %v229 = vsel %vm181, %v225, 0.0
          %v230 = vld [vmem:[%s132 + $0x80] sm:$0xff]
          %v231 = vld [vmem:[%s132 + $0x88] sm:$0xff]
          %v232 = vld [vmem:[%s132 + $0x90] sm:$0xff]
          %v233 = vld [vmem:[%s132 + $0x98] sm:$0xff]
          %v234 = vand.u32 2147483647, %v230
          %v235 = vand.u32 2147483647, %v231
          %v236 = vand.u32 2147483647, %v232
          %v237 = vand.u32 2147483647, %v233
          %v238 = vsel %vm178, %v234, 0.0
          %v239 = vsel %vm179, %v235, 0.0
          %v240 = vsel %vm180, %v236, 0.0
          %v241 = vsel %vm181, %v237, 0.0
          %v242 = vadd.f32 %v190, %v238
          %v243 = vadd.f32 %v191, %v239
          %v244 = vadd.f32 %v192, %v240
          %v245 = vadd.f32 %v193, %v241
          %v246 = vld [vmem:[%s132 + $0xa0] sm:$0xff]
          %v247 = vld [vmem:[%s132 + $0xa8] sm:$0xff]
          %v248 = vld [vmem:[%s132 + $0xb0] sm:$0xff]
          %v249 = vld [vmem:[%s132 + $0xb8] sm:$0xff]
          %v250 = vand.u32 2147483647, %v246
          %v251 = vand.u32 2147483647, %v247
          %v252 = vand.u32 2147483647, %v248
          %v253 = vand.u32 2147483647, %v249
          %v254 = vsel %vm178, %v250, 0.0
          %v255 = vsel %vm179, %v251, 0.0
          %v256 = vsel %vm180, %v252, 0.0
          %v257 = vsel %vm181, %v253, 0.0
          %v258 = vadd.f32 %v202, %v254
          %v259 = vadd.f32 %v203, %v255
          %v260 = vadd.f32 %v204, %v256
          %v261 = vadd.f32 %v205, %v257
          %v262 = vld [vmem:[%s132 + $0xc0] sm:$0xff]
          %v263 = vld [vmem:[%s132 + $0xc8] sm:$0xff]
          %v264 = vld [vmem:[%s132 + $0xd0] sm:$0xff]
          %v265 = vld [vmem:[%s132 + $0xd8] sm:$0xff]
          %v266 = vand.u32 2147483647, %v262
          %v267 = vand.u32 2147483647, %v263
          %v268 = vand.u32 2147483647, %v264
          %v269 = vand.u32 2147483647, %v265
          %v270 = vsel %vm178, %v266, 0.0
          %v271 = vsel %vm179, %v267, 0.0
          %v272 = vsel %vm180, %v268, 0.0
          %v273 = vsel %vm181, %v269, 0.0
          %v274 = vadd.f32 %v214, %v270
          %v275 = vadd.f32 %v215, %v271
          %v276 = vadd.f32 %v216, %v272
          %v277 = vadd.f32 %v217, %v273
          %v278 = vld [vmem:[%s132 + $0xe0] sm:$0xff]
          %v279 = vld [vmem:[%s132 + $0xe8] sm:$0xff]
          %v280 = vld [vmem:[%s132 + $0xf0] sm:$0xff]
          %v281 = vld [vmem:[%s132 + $0xf8] sm:$0xff]
          %v282 = vand.u32 2147483647, %v278
          %v283 = vand.u32 2147483647, %v279
          %v284 = vand.u32 2147483647, %v280
          %v285 = vand.u32 2147483647, %v281
          %v286 = vsel %vm178, %v282, 0.0
          %v287 = vsel %vm179, %v283, 0.0
          %v288 = vsel %vm180, %v284, 0.0
          %v289 = vsel %vm181, %v285, 0.0
          %v290 = vadd.f32 %v226, %v286
          %v291 = vadd.f32 %v227, %v287
          %v292 = vadd.f32 %v228, %v288
          %v293 = vadd.f32 %v229, %v289
          %v294 = vld [vmem:[%s132 + $0x100] sm:$0xff]
          %v295 = vld [vmem:[%s132 + $0x108] sm:$0xff]
          %v296 = vld [vmem:[%s132 + $0x110] sm:$0xff]
          %v297 = vld [vmem:[%s132 + $0x118] sm:$0xff]
          %v298 = vand.u32 2147483647, %v294
          %v299 = vand.u32 2147483647, %v295
          %v300 = vand.u32 2147483647, %v296
          %v301 = vand.u32 2147483647, %v297
          %v302 = vsel %vm178, %v298, 0.0
          %v303 = vsel %vm179, %v299, 0.0
          %v304 = vsel %vm180, %v300, 0.0
          %v305 = vsel %vm181, %v301, 0.0
          %v306 = vadd.f32 %v242, %v302
          %v307 = vadd.f32 %v243, %v303
          %v308 = vadd.f32 %v244, %v304
          %v309 = vadd.f32 %v245, %v305
          %v310 = vld [vmem:[%s132 + $0x120] sm:$0xff]
          %v311 = vld [vmem:[%s132 + $0x128] sm:$0xff]
          %v312 = vld [vmem:[%s132 + $0x130] sm:$0xff]
          %v313 = vld [vmem:[%s132 + $0x138] sm:$0xff]
          %v314 = vand.u32 2147483647, %v310
          %v315 = vand.u32 2147483647, %v311
          %v316 = vand.u32 2147483647, %v312
          %v317 = vand.u32 2147483647, %v313
          %v318 = vsel %vm178, %v314, 0.0
          %v319 = vsel %vm179, %v315, 0.0
          %v320 = vsel %vm180, %v316, 0.0
          %v321 = vsel %vm181, %v317, 0.0
          %v322 = vadd.f32 %v258, %v318
          %v323 = vadd.f32 %v259, %v319
          %v324 = vadd.f32 %v260, %v320
          %v325 = vadd.f32 %v261, %v321
          %v326 = vld [vmem:[%s132 + $0x140] sm:$0xff]
          %v327 = vld [vmem:[%s132 + $0x148] sm:$0xff]
          %v328 = vld [vmem:[%s132 + $0x150] sm:$0xff]
          %v329 = vld [vmem:[%s132 + $0x158] sm:$0xff]
          %v330 = vand.u32 2147483647, %v326
          %v331 = vand.u32 2147483647, %v327
          %v332 = vand.u32 2147483647, %v328
          %v333 = vand.u32 2147483647, %v329
          %v334 = vsel %vm178, %v330, 0.0
          %v335 = vsel %vm179, %v331, 0.0
          %v336 = vsel %vm180, %v332, 0.0
          %v337 = vsel %vm181, %v333, 0.0
          %v338 = vadd.f32 %v274, %v334
          %v339 = vadd.f32 %v275, %v335
          %v340 = vadd.f32 %v276, %v336
          %v341 = vadd.f32 %v277, %v337
          %v342 = vld [vmem:[%s132 + $0x160] sm:$0xff]
          %v343 = vld [vmem:[%s132 + $0x168] sm:$0xff]
          %v344 = vld [vmem:[%s132 + $0x170] sm:$0xff]
          %v345 = vld [vmem:[%s132 + $0x178] sm:$0xff]
          %v346 = vand.u32 2147483647, %v342
          %v347 = vand.u32 2147483647, %v343
          %v348 = vand.u32 2147483647, %v344
          %v349 = vand.u32 2147483647, %v345
          %v350 = vsel %vm178, %v346, 0.0
          %v351 = vsel %vm179, %v347, 0.0
          %v352 = vsel %vm180, %v348, 0.0
          %v353 = vsel %vm181, %v349, 0.0
          %v354 = vadd.f32 %v290, %v350
          %v355 = vadd.f32 %v291, %v351
          %v356 = vadd.f32 %v292, %v352
          %v357 = vadd.f32 %v293, %v353
          %v358 = vld [vmem:[%s132 + $0x180] sm:$0xff]
          %v359 = vld [vmem:[%s132 + $0x188] sm:$0xff]
          %v360 = vld [vmem:[%s132 + $0x190] sm:$0xff]
          %v361 = vld [vmem:[%s132 + $0x198] sm:$0xff]
          %v362 = vand.u32 2147483647, %v358
          %v363 = vand.u32 2147483647, %v359
          %v364 = vand.u32 2147483647, %v360
          %v365 = vand.u32 2147483647, %v361
          %v366 = vsel %vm178, %v362, 0.0
          %v367 = vsel %vm179, %v363, 0.0
          %v368 = vsel %vm180, %v364, 0.0
          %v369 = vsel %vm181, %v365, 0.0
          %v370 = vadd.f32 %v306, %v366
          %v371 = vadd.f32 %v307, %v367
          %v372 = vadd.f32 %v308, %v368
          %v373 = vadd.f32 %v309, %v369
          %v374 = vld [vmem:[%s132 + $0x1a0] sm:$0xff]
          %v375 = vld [vmem:[%s132 + $0x1a8] sm:$0xff]
          %v376 = vld [vmem:[%s132 + $0x1b0] sm:$0xff]
          %v377 = vld [vmem:[%s132 + $0x1b8] sm:$0xff]
          %v378 = vand.u32 2147483647, %v374
          %v379 = vand.u32 2147483647, %v375
          %v380 = vand.u32 2147483647, %v376
          %v381 = vand.u32 2147483647, %v377
          %v382 = vsel %vm178, %v378, 0.0
          %v383 = vsel %vm179, %v379, 0.0
          %v384 = vsel %vm180, %v380, 0.0
          %v385 = vsel %vm181, %v381, 0.0
          %v386 = vadd.f32 %v322, %v382
          %v387 = vadd.f32 %v323, %v383
          %v388 = vadd.f32 %v324, %v384
          %v389 = vadd.f32 %v325, %v385
          %v390 = vld [vmem:[%s132 + $0x1c0] sm:$0xff]
          %v391 = vld [vmem:[%s132 + $0x1c8] sm:$0xff]
          %v392 = vld [vmem:[%s132 + $0x1d0] sm:$0xff]
          %v393 = vld [vmem:[%s132 + $0x1d8] sm:$0xff]
          %v394 = vand.u32 2147483647, %v390
          %v395 = vand.u32 2147483647, %v391
          %v396 = vand.u32 2147483647, %v392
          %v397 = vand.u32 2147483647, %v393
          %v398 = vsel %vm178, %v394, 0.0
          %v399 = vsel %vm179, %v395, 0.0
          %v400 = vsel %vm180, %v396, 0.0
          %v401 = vsel %vm181, %v397, 0.0
          %v402 = vadd.f32 %v338, %v398
          %v403 = vadd.f32 %v339, %v399
          %v404 = vadd.f32 %v340, %v400
          %v405 = vadd.f32 %v341, %v401
          %v406 = vld [vmem:[%s132 + $0x1e0] sm:$0xff]
          %v407 = vld [vmem:[%s132 + $0x1e8] sm:$0xff]
          %v408 = vld [vmem:[%s132 + $0x1f0] sm:$0xff]
          %v409 = vld [vmem:[%s132 + $0x1f8] sm:$0xff]
          %v410 = vand.u32 2147483647, %v406
          %v411 = vand.u32 2147483647, %v407
          %v412 = vand.u32 2147483647, %v408
          %v413 = vand.u32 2147483647, %v409
          %v414 = vsel %vm178, %v410, 0.0
          %v415 = vsel %vm179, %v411, 0.0
          %v416 = vsel %vm180, %v412, 0.0
          %v417 = vsel %vm181, %v413, 0.0
          %v418 = vadd.f32 %v354, %v414
          %v419 = vadd.f32 %v355, %v415
          %v420 = vadd.f32 %v356, %v416
          %v421 = vadd.f32 %v357, %v417
          %v422 = vadd.f32 %v370, %v386
          %v423 = vadd.f32 %v371, %v387
          %v424 = vadd.f32 %v372, %v388
          %v425 = vadd.f32 %v373, %v389
          %v426 = vadd.f32 %v422, %v402
          %v427 = vadd.f32 %v423, %v403
          %v428 = vadd.f32 %v424, %v404
          %v429 = vadd.f32 %v425, %v405
          %v430 = vadd.f32 %v426, %v418
          %v431 = vadd.f32 %v427, %v419
          %v432 = vadd.f32 %v428, %v420
          %v433 = vadd.f32 %v429, %v421
          %v434 = vadd.f32 %v430, %v431
          %v435 = vadd.f32 %v434, %v432
          %v436 = vadd.f32 %v435, %v433
          %v437 = vadd.f32 %v165, %v436
          %438 = vst [vmem:[%s155] sm:$0xff] %v437
        $region36: #{run.1} parent=23 // pred_fallthru
          _
        %p439 = scmp.ne.s32.totalorder %s22, 0
        // Predicated region
        $region37: #{run.1} parent=23 // pred_check
          %p440 = pneg %p439
        $region38: #{run.1} parent=23 // pred_check_branch
          %442 = sbr.rel (%p440) target = $region40
        $region39: #{run.1} parent=23 // pred_region
          %v443 = vld [vmem:[%s155] sm:$0xff]
          %v444 = vld [vmem:[%s132] sm:$0xff]
          %v445 = vld [vmem:[%s132 + $0x8] sm:$0xff]
          %v446 = vld [vmem:[%s132 + $0x10] sm:$0xff]
          %v447 = vld [vmem:[%s132 + $0x18] sm:$0xff]
          %v448 = vand.u32 2147483647, %v444
          %v449 = vand.u32 2147483647, %v445
          %v450 = vand.u32 2147483647, %v446
          %v451 = vand.u32 2147483647, %v447
          %v452 = vld [vmem:[%s132 + $0x20] sm:$0xff]
          %v453 = vld [vmem:[%s132 + $0x28] sm:$0xff]
          %v454 = vld [vmem:[%s132 + $0x30] sm:$0xff]
          %v455 = vld [vmem:[%s132 + $0x38] sm:$0xff]
          %v456 = vand.u32 2147483647, %v452
          %v457 = vand.u32 2147483647, %v453
          %v458 = vand.u32 2147483647, %v454
          %v459 = vand.u32 2147483647, %v455
          %v460 = vld [vmem:[%s132 + $0x40] sm:$0xff]
          %v461 = vld [vmem:[%s132 + $0x48] sm:$0xff]
          %v462 = vld [vmem:[%s132 + $0x50] sm:$0xff]
          %v463 = vld [vmem:[%s132 + $0x58] sm:$0xff]
          %v464 = vand.u32 2147483647, %v460
          %v465 = vand.u32 2147483647, %v461
          %v466 = vand.u32 2147483647, %v462
          %v467 = vand.u32 2147483647, %v463
          %v468 = vld [vmem:[%s132 + $0x60] sm:$0xff]
          %v469 = vld [vmem:[%s132 + $0x68] sm:$0xff]
          %v470 = vld [vmem:[%s132 + $0x70] sm:$0xff]
          %v471 = vld [vmem:[%s132 + $0x78] sm:$0xff]
          %v472 = vand.u32 2147483647, %v468
          %v473 = vand.u32 2147483647, %v469
          %v474 = vand.u32 2147483647, %v470
          %v475 = vand.u32 2147483647, %v471
          %v476 = vld [vmem:[%s132 + $0x80] sm:$0xff]
          %v477 = vld [vmem:[%s132 + $0x88] sm:$0xff]
          %v478 = vld [vmem:[%s132 + $0x90] sm:$0xff]
          %v479 = vld [vmem:[%s132 + $0x98] sm:$0xff]
          %v480 = vand.u32 2147483647, %v476
          %v481 = vand.u32 2147483647, %v477
          %v482 = vand.u32 2147483647, %v478
          %v483 = vand.u32 2147483647, %v479
          %v484 = vadd.f32 %v448, %v480
          %v485 = vadd.f32 %v449, %v481
          %v486 = vadd.f32 %v450, %v482
          %v487 = vadd.f32 %v451, %v483
          %v488 = vld [vmem:[%s132 + $0xa0] sm:$0xff]
          %v489 = vld [vmem:[%s132 + $0xa8] sm:$0xff]
          %v490 = vld [vmem:[%s132 + $0xb0] sm:$0xff]
          %v491 = vld [vmem:[%s132 + $0xb8] sm:$0xff]
          %v492 = vand.u32 2147483647, %v488
          %v493 = vand.u32 2147483647, %v489
          %v494 = vand.u32 2147483647, %v490
          %v495 = vand.u32 2147483647, %v491
          %v496 = vadd.f32 %v456, %v492
          %v497 = vadd.f32 %v457, %v493
          %v498 = vadd.f32 %v458, %v494
          %v499 = vadd.f32 %v459, %v495
          %v500 = vld [vmem:[%s132 + $0xc0] sm:$0xff]
          %v501 = vld [vmem:[%s132 + $0xc8] sm:$0xff]
          %v502 = vld [vmem:[%s132 + $0xd0] sm:$0xff]
          %v503 = vld [vmem:[%s132 + $0xd8] sm:$0xff]
          %v504 = vand.u32 2147483647, %v500
          %v505 = vand.u32 2147483647, %v501
          %v506 = vand.u32 2147483647, %v502
          %v507 = vand.u32 2147483647, %v503
          %v508 = vadd.f32 %v464, %v504
          %v509 = vadd.f32 %v465, %v505
          %v510 = vadd.f32 %v466, %v506
          %v511 = vadd.f32 %v467, %v507
          %v512 = vld [vmem:[%s132 + $0xe0] sm:$0xff]
          %v513 = vld [vmem:[%s132 + $0xe8] sm:$0xff]
          %v514 = vld [vmem:[%s132 + $0xf0] sm:$0xff]
          %v515 = vld [vmem:[%s132 + $0xf8] sm:$0xff]
          %v516 = vand.u32 2147483647, %v512
          %v517 = vand.u32 2147483647, %v513
          %v518 = vand.u32 2147483647, %v514
          %v519 = vand.u32 2147483647, %v515
          %v520 = vadd.f32 %v472, %v516
          %v521 = vadd.f32 %v473, %v517
          %v522 = vadd.f32 %v474, %v518
          %v523 = vadd.f32 %v475, %v519
          %v524 = vld [vmem:[%s132 + $0x100] sm:$0xff]
          %v525 = vld [vmem:[%s132 + $0x108] sm:$0xff]
          %v526 = vld [vmem:[%s132 + $0x110] sm:$0xff]
          %v527 = vld [vmem:[%s132 + $0x118] sm:$0xff]
          %v528 = vand.u32 2147483647, %v524
          %v529 = vand.u32 2147483647, %v525
          %v530 = vand.u32 2147483647, %v526
          %v531 = vand.u32 2147483647, %v527
          %v532 = vadd.f32 %v484, %v528
          %v533 = vadd.f32 %v485, %v529
          %v534 = vadd.f32 %v486, %v530
          %v535 = vadd.f32 %v487, %v531
          %v536 = vld [vmem:[%s132 + $0x120] sm:$0xff]
          %v537 = vld [vmem:[%s132 + $0x128] sm:$0xff]
          %v538 = vld [vmem:[%s132 + $0x130] sm:$0xff]
          %v539 = vld [vmem:[%s132 + $0x138] sm:$0xff]
          %v540 = vand.u32 2147483647, %v536
          %v541 = vand.u32 2147483647, %v537
          %v542 = vand.u32 2147483647, %v538
          %v543 = vand.u32 2147483647, %v539
          %v544 = vadd.f32 %v496, %v540
          %v545 = vadd.f32 %v497, %v541
          %v546 = vadd.f32 %v498, %v542
          %v547 = vadd.f32 %v499, %v543
          %v548 = vld [vmem:[%s132 + $0x140] sm:$0xff]
          %v549 = vld [vmem:[%s132 + $0x148] sm:$0xff]
          %v550 = vld [vmem:[%s132 + $0x150] sm:$0xff]
          %v551 = vld [vmem:[%s132 + $0x158] sm:$0xff]
          %v552 = vand.u32 2147483647, %v548
          %v553 = vand.u32 2147483647, %v549
          %v554 = vand.u32 2147483647, %v550
          %v555 = vand.u32 2147483647, %v551
          %v556 = vadd.f32 %v508, %v552
          %v557 = vadd.f32 %v509, %v553
          %v558 = vadd.f32 %v510, %v554
          %v559 = vadd.f32 %v511, %v555
          %v560 = vld [vmem:[%s132 + $0x160] sm:$0xff]
          %v561 = vld [vmem:[%s132 + $0x168] sm:$0xff]
          %v562 = vld [vmem:[%s132 + $0x170] sm:$0xff]
          %v563 = vld [vmem:[%s132 + $0x178] sm:$0xff]
          %v564 = vand.u32 2147483647, %v560
          %v565 = vand.u32 2147483647, %v561
          %v566 = vand.u32 2147483647, %v562
          %v567 = vand.u32 2147483647, %v563
          %v568 = vadd.f32 %v520, %v564
          %v569 = vadd.f32 %v521, %v565
          %v570 = vadd.f32 %v522, %v566
          %v571 = vadd.f32 %v523, %v567
          %v572 = vld [vmem:[%s132 + $0x180] sm:$0xff]
          %v573 = vld [vmem:[%s132 + $0x188] sm:$0xff]
          %v574 = vld [vmem:[%s132 + $0x190] sm:$0xff]
          %v575 = vld [vmem:[%s132 + $0x198] sm:$0xff]
          %v576 = vand.u32 2147483647, %v572
          %v577 = vand.u32 2147483647, %v573
          %v578 = vand.u32 2147483647, %v574
          %v579 = vand.u32 2147483647, %v575
          %v580 = vadd.f32 %v532, %v576
          %v581 = vadd.f32 %v533, %v577
          %v582 = vadd.f32 %v534, %v578
          %v583 = vadd.f32 %v535, %v579
          %v584 = vld [vmem:[%s132 + $0x1a0] sm:$0xff]
          %v585 = vld [vmem:[%s132 + $0x1a8] sm:$0xff]
          %v586 = vld [vmem:[%s132 + $0x1b0] sm:$0xff]
          %v587 = vld [vmem:[%s132 + $0x1b8] sm:$0xff]
          %v588 = vand.u32 2147483647, %v584
          %v589 = vand.u32 2147483647, %v585
          %v590 = vand.u32 2147483647, %v586
          %v591 = vand.u32 2147483647, %v587
          %v592 = vadd.f32 %v544, %v588
          %v593 = vadd.f32 %v545, %v589
          %v594 = vadd.f32 %v546, %v590
          %v595 = vadd.f32 %v547, %v591
          %v596 = vld [vmem:[%s132 + $0x1c0] sm:$0xff]
          %v597 = vld [vmem:[%s132 + $0x1c8] sm:$0xff]
          %v598 = vld [vmem:[%s132 + $0x1d0] sm:$0xff]
          %v599 = vld [vmem:[%s132 + $0x1d8] sm:$0xff]
          %v600 = vand.u32 2147483647, %v596
          %v601 = vand.u32 2147483647, %v597
          %v602 = vand.u32 2147483647, %v598
          %v603 = vand.u32 2147483647, %v599
          %v604 = vadd.f32 %v556, %v600
          %v605 = vadd.f32 %v557, %v601
          %v606 = vadd.f32 %v558, %v602
          %v607 = vadd.f32 %v559, %v603
          %v608 = vld [vmem:[%s132 + $0x1e0] sm:$0xff]
          %v609 = vld [vmem:[%s132 + $0x1e8] sm:$0xff]
          %v610 = vld [vmem:[%s132 + $0x1f0] sm:$0xff]
          %v611 = vld [vmem:[%s132 + $0x1f8] sm:$0xff]
          %v612 = vand.u32 2147483647, %v608
          %v613 = vand.u32 2147483647, %v609
          %v614 = vand.u32 2147483647, %v610
          %v615 = vand.u32 2147483647, %v611
          %v616 = vadd.f32 %v568, %v612
          %v617 = vadd.f32 %v569, %v613
          %v618 = vadd.f32 %v570, %v614
          %v619 = vadd.f32 %v571, %v615
          %v620 = vadd.f32 %v580, %v592
          %v621 = vadd.f32 %v581, %v593
          %v622 = vadd.f32 %v582, %v594
          %v623 = vadd.f32 %v583, %v595
          %v624 = vadd.f32 %v620, %v604
          %v625 = vadd.f32 %v621, %v605
          %v626 = vadd.f32 %v622, %v606
          %v627 = vadd.f32 %v623, %v607
          %v628 = vadd.f32 %v624, %v616
          %v629 = vadd.f32 %v625, %v617
          %v630 = vadd.f32 %v626, %v618
          %v631 = vadd.f32 %v627, %v619
          %v632 = vadd.f32 %v628, %v629
          %v633 = vadd.f32 %v632, %v630
          %v634 = vadd.f32 %v633, %v631
          %v635 = vadd.f32 %v443, %v634
          %636 = vst [vmem:[%s155] sm:$0xff] %v635
        $region40: #{run.1} parent=23 // pred_fallthru
          _
        %p637 = scmp.lt.s32.totalorder %s21, 1
        %s638 = scalar_select %p637, %s21, 1
        %s639 = smul.addr %s638, 8
        %s640 = scalar_lea.vmem %s2, %s639
        // Predicated region
        $region41: #{run.1} parent=23 // pred_check
          %p641 = pneg %p75
        $region42: #{run.1} parent=23 // pred_check_branch
          %643 = sbr.rel (%p641) target = $region44
        $region43: #{run.1} parent=23 // pred_region
          _
        $region44: #{run.1} parent=23 // pred_fallthru
          _
      $region24: #{run.1} parent=5 // pred_fallthru
        _
      %p644 = scmp.le.s32.totalorder 2, %s12
      // Predicated region
      $region45: #{run.1} parent=5 // pred_check
        %p645 = pneg %p644
      $region46: #{run.1} parent=5 // pred_check_branch
        %647 = sbr.rel (%p645) target = $region48
      $region47: #{run.1} parent=5 // pred_region
        %s648 = ssub.s32 %s12, 2
        // Predicated region
        $region49: #{run.1} parent=47 // pred_check
          %p649 = pneg %p81
        $region50: #{run.1} parent=47 // pred_check_branch
          %651 = sbr.rel (%p649) target = $region52
        $region51: #{run.1} parent=47 // pred_region
          %p652 = scmp.lt.s32.totalorder %s23, 1
          %s653 = scalar_select %p652, %s23, 1
          %s654 = smul.addr %s653, 8
          %s655 = scalar_lea.vmem %s2, %s654
        $region52: #{run.1} parent=47 // pred_fallthru
          _
      $region48: #{run.1} parent=5 // pred_fallthru
        _
    $region6: #{run.1} parent=1 // loop_footer
      %s16 = sadd.s32 1, %s12
    $region7: #{run.1} parent=1 // loop_footer_branch
      %11 = sbr.rel target = $region3
    $region8: #{run.1} parent=1 // loop_exit
      _
    %656 = vsyncpa [#allocation5], 1
    %s657 = scalar_lea.sflag [#allocation5], 1
    %658 = vsyncpa %s657, 1

</llo_original>
